<compile_context>
chip_gen: v7x
topology: tpu7x:2x2x1
jax: 0.10.0
libtpu: 0.0.40
codegen_flags: <defaults>
</compile_context>

<pallas_src>
import functools

import jax
import jax.numpy as jnp
import numpy as np
from jax.experimental import pallas as pl
from jax.experimental.pallas import tpu as pltpu  # noqa: F401  (TPU backend)

_BN_EPS = 1e-5


def emb_sz_rule(n_cat):
    return min(600, round(1.6 * n_cat ** 0.56))


def _round_up(x, m):
    return (x + m - 1) // m * m


# ------------------------------------------------------------------ layout

def build_meta(config):
    """Static (compile-time) sizes + packed-parameter-slab layout."""
    num_ins = int(config["static_num_ins"])
    num_cats = tuple(int(n) for n in config["static_cat_ins"])
    emb_dims = tuple(emb_sz_rule(n) for n in num_cats)
    fc_sizes = tuple([num_ins + sum(emb_dims)] + list(config["fc_sizes"]))
    out_features = tuple(int(n) for n in config["out_features"])
    total_out = sum(out_features)
    total_cat = sum(num_cats)
    n_fc = len(fc_sizes) - 1

    # (name, rows, cols) blocks, each at an 8-aligned (sublane-aligned) row
    # offset so the static kernel-side views stay cheap.
    blocks = [("w0n", num_ins, fc_sizes[1]),
              ("t_all", max(total_cat, 1), fc_sizes[1]),
              ("b0", 1, fc_sizes[1])]
    for li in range(1, n_fc):
        blocks.append((f"w{li}", fc_sizes[li], fc_sizes[li + 1]))
        blocks.append((f"b{li}", 1, fc_sizes[li + 1]))
    blocks.append(("head_w", fc_sizes[-1], total_out))
    blocks.append(("head_b", 1, total_out))
    blocks.append(("sig", 3, total_out))          # mask / scale / shift rows

    offsets, row, max_cols = {}, 0, 1
    for name, r, c in blocks:
        offsets[name] = row
        row = _round_up(row + r, 8)
        max_cols = max(max_cols, c)

    has_sigmoid = any(
        task == "regression" and rng is not None
        for task, rng in zip(config["out_tasks"], config["out_ranges"]))

    return dict(
        num_ins=num_ins, num_cats=num_cats, emb_dims=emb_dims,
        fc_sizes=fc_sizes, n_fc=n_fc,
        out_features=out_features, total_out=total_out, total_cat=total_cat,
        offsets=offsets,
        slab_rows=_round_up(row, 8),
        slab_cols=_round_up(max_cols, 128),     # lane-aligned slab width
        has_sigmoid=has_sigmoid,
    )


# ------------------------------------------------------------------ kernel

def _fused_forward_kernel(sn_ref, cat_ref, slab_ref, out_ref, *, meta):
    """Fused BaseNN eval forward.

    Operands: static_num (B, num_ins) f32, static_cat (B, n_tables) int32,
    param slab (slab_rows, slab_cols) f32; output (B, total_out) f32.
    All BN affines / embedding tables are pre-folded into the slab.
    """
    B = sn_ref.shape[0]
    fs = meta["fc_sizes"]
    off = meta["offsets"]
    num_ins = meta["num_ins"]
    total_cat = meta["total_cat"]
    total_out = meta["total_out"]

    def view(name, rows, cols, extra=0):
        r0 = off[name] + extra
        return slab_ref[r0:r0 + rows, :cols]        # static VMEM view -> load

    sn = sn_ref[...]                                # (B, num_ins)

    # First fc layer: bn0, emb lookup, emb_drop (identity) and the
    # cat([static_num, emb]) @ W0 are all pre-folded:
    #   h = sn @ W0n' + onehot(static_cat) @ T_all + b0'
    h = jnp.dot(sn, view("w0n", num_ins, fs[1]),
                preferred_element_type=jnp.float32)
    if total_cat > 0:
        cat = cat_ref[...]                          # (B, n_tables) int32
        col = jax.lax.broadcasted_iota(jnp.int32, (B, total_cat), 1)
        oh = None
        base = 0
        for t, n_cat in enumerate(meta["num_cats"]):
            hit = col == (cat[:, t:t + 1] + base)
            oh = hit if oh is None else (oh | hit)
            base += n_cat
        h = h + jnp.dot(oh.astype(jnp.float32),
                        view("t_all", total_cat, fs[1]),
                        preferred_element_type=jnp.float32)
    h = jnp.maximum(h + view("b0", 1, fs[1]), 0.0)   # Linear bias + ReLU

    # Remaining fc layers (previous layer's BN already folded into W/b;
    # Dropout is identity in eval mode).
    for li in range(1, meta["n_fc"]):
        h = jnp.dot(h, view(f"w{li}", fs[li], fs[li + 1]),
                    preferred_element_type=jnp.float32)
        h = jnp.maximum(h + view(f"b{li}", 1, fs[li + 1]), 0.0)

    # All output heads fused into one matmul (last fc BN folded in).
    y = (jnp.dot(h, view("head_w", fs[-1], total_out),
                 preferred_element_type=jnp.float32)
         + view("head_b", 1, total_out))

    # RangeSigmoid on regression-head columns: one sigmoid pass + one select.
    if meta["has_sigmoid"]:
        mask = view("sig", 1, total_out, 0)
        scale = view("sig", 1, total_out, 1)
        shift = view("sig", 1, total_out, 2)
        y = jnp.where(mask > 0.5, jax.nn.sigmoid(y) * scale + shift, y)

    out_ref[...] = y


# ------------------------------------------------------------------ folding

def fold_params(params, config, meta):
    """One-time host-side folding (call at parameter-load time, NOT per step):
    eval-BN -> adjacent Linear, embedding tables -> W0, fused heads,
    RangeSigmoid constants; everything packed into a single f32 slab."""
    hp = jax.lax.Precision.HIGHEST
    num_ins = meta["num_ins"]

    def bn_fold(g, b, m, v):
        s = g * jax.lax.rsqrt(v + _BN_EPS)
        return s, b - m * s

    slab = jnp.zeros((meta["slab_rows"], meta["slab_cols"]), jnp.float32)

    def put(slab, name, arr, extra_row=0):
        r0 = meta["offsets"][name] + extra_row
        r, c = arr.shape
        return slab.at[r0:r0 + r, :c].set(arr.astype(jnp.float32))

    # Layer 0: bn0 folds into the numeric rows of W0 and b0; the embedding
    # tables fold through W0's embedding row block.
    w0, b0, g0, be0, m0, v0 = params["fc"][0]
    s0, sh0 = bn_fold(*params["bn0"])                         # (1, num_ins)
    slab = put(slab, "w0n", w0[:num_ins] * s0.reshape(-1, 1))
    slab = put(slab, "b0", b0 + jnp.dot(sh0, w0[:num_ins], precision=hp))

    t_blocks, roff = [], num_ins
    for tbl, d in zip(params["embs"], meta["emb_dims"]):
        t_blocks.append(jnp.dot(tbl, w0[roff:roff + d], precision=hp))
        roff += d
    if t_blocks:
        slab = put(slab, "t_all", jnp.concatenate(t_blocks, axis=0))

    # BN after layer i folds into layer i+1's Linear (ReLU stays in between).
    prev_s, prev_sh = bn_fold(g0, be0, m0, v0)
    for li, (w, b, g, be, m, v) in enumerate(params["fc"][1:], start=1):
        slab = put(slab, f"w{li}", w * prev_s.reshape(-1, 1))
        slab = put(slab, f"b{li}", b + jnp.dot(prev_sh, w, precision=hp))
        prev_s, prev_sh = bn_fold(g, be, m, v)

    # Fused output heads, with the last fc BN folded in.
    head_w = jnp.concatenate([w for (w, _) in params["heads"]], axis=1)
    head_b = jnp.concatenate([b for (_, b) in params["heads"]], axis=1)
    slab = put(slab, "head_w", head_w * prev_s.reshape(-1, 1))
    slab = put(slab, "head_b", head_b + jnp.dot(prev_sh, head_w, precision=hp))

    # RangeSigmoid column constants.
    total_out = meta["total_out"]
    mask = np.zeros((1, total_out), np.float32)
    scale = np.ones((1, total_out), np.float32)
    shift = np.zeros((1, total_out), np.float32)
    c = 0
    for nf, task, rng in zip(meta["out_features"], config["out_tasks"],
                             config["out_ranges"]):
        if task == "regression" and rng is not None:
            mask[0, c:c + nf] = 1.0
            scale[0, c:c + nf] = float(rng[1]) - float(rng[0])
            shift[0, c:c + nf] = float(rng[0])
        c += nf
    slab = put(slab, "sig", jnp.asarray(mask), 0)
    slab = put(slab, "sig", jnp.asarray(scale), 1)
    slab = put(slab, "sig", jnp.asarray(shift), 2)
    return slab


# ------------------------------------------------------------------ wrapper

def basenn_forward(slab, ins, *, meta):
    """Eval-mode BaseNN forward: one gridless pallas_call, 3 operands."""
    static_num, static_cat = ins
    B = static_num.shape[0]
    total_out = meta["total_out"]

    kernel = functools.partial(_fused_forward_kernel, meta=meta)
    y = pl.pallas_call(
        kernel,
        out_shape=jax.ShapeDtypeStruct((B, total_out), jnp.float32),
        # Gridless: total footprint << 1 MiB, far under VMEM on v5e/v6e/v7x.
        # If B grows, tile it with a 'parallel' grid axis (2 TCs on v7x) and
        # make the output slab lane-dense.
    )(static_num, static_cat.astype(jnp.int32), slab)

    # Split the fused head slab back into per-head outputs.
    outs, c = [], 0
    for nf in meta["out_features"]:
        outs.append(y[:, c:c + nf])
        c += nf
    return outs


# ------------------------------------------------------------------ reference

def forward_ref(params, static_num, static_cat, config):
    """Pure-JAX eval-mode reference mirroring the PyTorch module."""
    eps = _BN_EPS
    hp = jax.lax.Precision.HIGHEST
    emb = jnp.concatenate(
        [params["embs"][i][static_cat[:, i]] for i in range(len(params["embs"]))],
        axis=1)
    g, b, mu, var = params["bn0"]
    x_num = (static_num - mu) / jnp.sqrt(var + eps) * g + b
    h = jnp.concatenate([x_num, emb], axis=1)
    for (w, bb, gg, beta, mean, v) in params["fc"]:
        h = jnp.maximum(jnp.dot(h, w, precision=hp) + bb, 0.0)
        h = (h - mean) / jnp.sqrt(v + eps) * gg + beta
    outs = []
    for (w, bb), task, rng in zip(params["heads"], config["out_tasks"],
                                  config["out_ranges"]):
        y = jnp.dot(h, w, precision=hp) + bb
        if task == "regression" and rng is not None:
            y = jax.nn.sigmoid(y) * (rng[1] - rng[0]) + rng[0]
        outs.append(y)
    return outs


# ------------------------------------------------------------------ params

def init_params(config, key):
    params = {"embs": [], "fc": [], "heads": []}

    def nk():
        nonlocal key
        key, sub = jax.random.split(key)
        return sub

    for n_cat in config["static_cat_ins"]:
        d = emb_sz_rule(n_cat)
        params["embs"].append(0.1 * jax.random.normal(nk(), (n_cat, d),
                                                      jnp.float32))

    n_num = config["static_num_ins"]
    params["bn0"] = (
        1.0 + 0.1 * jax.random.normal(nk(), (1, n_num), jnp.float32),          # gamma
        0.1 * jax.random.normal(nk(), (1, n_num), jnp.float32),                # beta
        0.1 * jax.random.normal(nk(), (1, n_num), jnp.float32),                # running mean
        1.0 + 0.1 * jnp.abs(jax.random.normal(nk(), (1, n_num), jnp.float32)), # running var
    )

    emb_total = sum(emb_sz_rule(n) for n in config["static_cat_ins"])
    fc_sizes = [emb_total + n_num] + config["fc_sizes"]
    for ni, nf in zip(fc_sizes[:-1], fc_sizes[1:]):
        w = jax.random.normal(nk(), (ni, nf), jnp.float32) / jnp.sqrt(float(ni))
        b = 0.01 * jax.random.normal(nk(), (1, nf), jnp.float32)
        g = 1.0 + 0.1 * jax.random.normal(nk(), (1, nf), jnp.float32)
        beta = 0.1 * jax.random.normal(nk(), (1, nf), jnp.float32)
        mu = 0.1 * jax.random.normal(nk(), (1, nf), jnp.float32)
        var = 1.0 + 0.1 * jnp.abs(jax.random.normal(nk(), (1, nf), jnp.float32))
        params["fc"].append((w, b, g, beta, mu, var))

    for out_feature in config["out_features"]:
        w = jax.random.normal(nk(), (fc_sizes[-1], out_feature),
                              jnp.float32) / jnp.sqrt(float(fc_sizes[-1]))
        b = 0.01 * jax.random.normal(nk(), (1, out_feature), jnp.float32)
        params["heads"].append((w, b))
    return params


# ------------------------------------------------------------------ main

if __name__ == "__main__":
    config = {
        "static_cat_ins": [10, 7],
        "static_num_ins": 3,
        "emb_p": 0.1,
        "fc_sizes": [32, 16],
        "fc_p": [0.1, 0.1],
        "out_tasks": ["regression", "classification"],
        "out_ranges": [(0.0, 10.0), None],
        "out_features": [1, 3],
    }

    params = init_params(config, jax.random.PRNGKey(0))
    meta = build_meta(config)

    # One-time parameter folding / packing (outside the per-step jit path).
    slab = jax.block_until_ready(fold_params(params, config, meta))

    B = 8
    kn, kc = jax.random.split(jax.random.PRNGKey(0))
    static_num = jax.random.normal(kn, (B, config["static_num_ins"]), jnp.float32)
    cat_keys = jax.random.split(kc, len(config["static_cat_ins"]))
    static_cat = jnp.stack(
        [jax.random.randint(k, (B,), 0, n, jnp.int32)
         for k, n in zip(cat_keys, config["static_cat_ins"])], axis=1)

    # Per-step path: exactly one fused pallas_call + output split under jit.
    fwd = jax.jit(functools.partial(basenn_forward, meta=meta))
    outs = fwd(slab, (static_num, static_cat))
    for o in outs:
        jax.block_until_ready(o)

    # Correctness vs pure-JAX eval-mode reference (loose tol absorbs default
    # MXU f32 precision vs Precision.HIGHEST in the reference; structural
    # bugs would be O(0.1 - 10)).
    refs = forward_ref(params, static_num, static_cat, config)
    for o, r in zip(outs, refs):
        np.testing.assert_allclose(np.asarray(o), np.asarray(r),
                                   rtol=5e-2, atol=5e-2)

    assert outs[0].shape == (B, 1) and outs[1].shape == (B, 3)
    # TODO(synk): dropout / emb_drop and BatchNorm training-mode statistics not
    # implemented (eval-mode forward only; training needs RNG + batch stats,
    # and the BN-into-Linear folding would have to be undone).
    print("KERNEL_OK")
</pallas_src>

<mosaic_0001>
module attributes {stable_mosaic.version = 11 : i64} {
  func.func @_fused_forward_kernel(%arg0: memref<8x3xf32, #tpu.memory_space<vmem>>, %arg1: memref<8x2xi32, #tpu.memory_space<vmem>>, %arg2: memref<112x128xf32, #tpu.memory_space<vmem>>, %arg3: memref<8x4xf32, #tpu.memory_space<vmem>>) attributes {dimension_semantics = [], scalar_prefetch = 0 : i64, scratch_operands = 0 : i64, tpu.core_type = #tpu.core_type<tc>} {
    %c0 = arith.constant 0 : index
    %c0_0 = arith.constant 0 : index
    %0 = vector.load %arg0[%c0, %c0_0] : memref<8x3xf32, #tpu.memory_space<vmem>>, vector<8x3xf32>
    %c0_1 = arith.constant 0 : index
    %c0_2 = arith.constant 0 : index
    %1 = vector.load %arg2[%c0_1, %c0_2] : memref<112x128xf32, #tpu.memory_space<vmem>>, vector<3x32xf32>
    %cst = arith.constant dense<0.000000e+00> : vector<8x32xf32>
    %2 = tpu.matmul %0, %1, %cst {dimension_numbers = #tpu.dot_dimension_numbers<[1], [0], [0], [1], [0, 0, 1, 1], [], []>} : vector<8x3xf32>, vector<3x32xf32>, vector<8x32xf32> -> vector<8x32xf32>
    %c0_3 = arith.constant 0 : index
    %c0_4 = arith.constant 0 : index
    %3 = vector.load %arg1[%c0_3, %c0_4] : memref<8x2xi32, #tpu.memory_space<vmem>>, vector<8x2xi32>
    %4 = tpu.iota {dimensions = array<i32: 1>} : vector<8x17xi32>
    %5 = vector.extract_strided_slice %3 {offsets = [0, 0], sizes = [8, 1], strides = [1, 1]} : vector<8x2xi32> to vector<8x1xi32>
    %c0_i32 = arith.constant 0 : i32
    %6 = vector.broadcast %c0_i32 : i32 to vector<8x1xi32>
    %7 = arith.addi %5, %6 : vector<8x1xi32>
    %8 = vector.broadcast %7 : vector<8x1xi32> to vector<8x17xi32>
    %9 = arith.cmpi eq, %4, %8 : vector<8x17xi32>
    %10 = vector.extract_strided_slice %3 {offsets = [0, 1], sizes = [8, 1], strides = [1, 1]} : vector<8x2xi32> to vector<8x1xi32>
    %c10_i32 = arith.constant 10 : i32
    %11 = vector.broadcast %c10_i32 : i32 to vector<8x1xi32>
    %12 = arith.addi %10, %11 : vector<8x1xi32>
    %13 = vector.broadcast %12 : vector<8x1xi32> to vector<8x17xi32>
    %14 = arith.cmpi eq, %4, %13 : vector<8x17xi32>
    %15 = arith.ori %9, %14 : vector<8x17xi1>
    %16 = arith.extui %15 : vector<8x17xi1> to vector<8x17xi32>
    %17 = arith.sitofp %16 : vector<8x17xi32> to vector<8x17xf32>
    %c8 = arith.constant 8 : index
    %c0_5 = arith.constant 0 : index
    %18 = vector.load %arg2[%c8, %c0_5] : memref<112x128xf32, #tpu.memory_space<vmem>>, vector<17x32xf32>
    %cst_6 = arith.constant dense<0.000000e+00> : vector<8x32xf32>
    %19 = tpu.matmul %17, %18, %cst_6 {dimension_numbers = #tpu.dot_dimension_numbers<[1], [0], [0], [1], [0, 0, 1, 1], [], []>} : vector<8x17xf32>, vector<17x32xf32>, vector<8x32xf32> -> vector<8x32xf32>
    %20 = arith.addf %2, %19 : vector<8x32xf32>
    %c32 = arith.constant 32 : index
    %c0_7 = arith.constant 0 : index
    %21 = vector.load %arg2[%c32, %c0_7] : memref<112x128xf32, #tpu.memory_space<vmem>>, vector<1x32xf32>
    %22 = vector.broadcast %21 : vector<1x32xf32> to vector<8x32xf32>
    %23 = arith.addf %20, %22 : vector<8x32xf32>
    %cst_8 = arith.constant 0.000000e+00 : f32
    %24 = vector.broadcast %cst_8 : f32 to vector<8x32xf32>
    %25 = arith.maximumf %23, %24 : vector<8x32xf32>
    %c40 = arith.constant 40 : index
    %c0_9 = arith.constant 0 : index
    %26 = vector.load %arg2[%c40, %c0_9] : memref<112x128xf32, #tpu.memory_space<vmem>>, vector<32x16xf32>
    %cst_10 = arith.constant dense<0.000000e+00> : vector<8x16xf32>
    %27 = tpu.matmul %25, %26, %cst_10 {dimension_numbers = #tpu.dot_dimension_numbers<[1], [0], [0], [1], [0, 0, 1, 1], [], []>} : vector<8x32xf32>, vector<32x16xf32>, vector<8x16xf32> -> vector<8x16xf32>
    %c72 = arith.constant 72 : index
    %c0_11 = arith.constant 0 : index
    %28 = vector.load %arg2[%c72, %c0_11] : memref<112x128xf32, #tpu.memory_space<vmem>>, vector<1x16xf32>
    %29 = vector.broadcast %28 : vector<1x16xf32> to vector<8x16xf32>
    %30 = arith.addf %27, %29 : vector<8x16xf32>
    %cst_12 = arith.constant 0.000000e+00 : f32
    %31 = vector.broadcast %cst_12 : f32 to vector<8x16xf32>
    %32 = arith.maximumf %30, %31 : vector<8x16xf32>
    %c80 = arith.constant 80 : index
    %c0_13 = arith.constant 0 : index
    %33 = vector.load %arg2[%c80, %c0_13] : memref<112x128xf32, #tpu.memory_space<vmem>>, vector<16x4xf32>
    %cst_14 = arith.constant dense<0.000000e+00> : vector<8x4xf32>
    %34 = tpu.matmul %32, %33, %cst_14 {dimension_numbers = #tpu.dot_dimension_numbers<[1], [0], [0], [1], [0, 0, 1, 1], [], []>} : vector<8x16xf32>, vector<16x4xf32>, vector<8x4xf32> -> vector<8x4xf32>
    %c96 = arith.constant 96 : index
    %c0_15 = arith.constant 0 : index
    %35 = vector.load %arg2[%c96, %c0_15] : memref<112x128xf32, #tpu.memory_space<vmem>>, vector<1x4xf32>
    %36 = vector.broadcast %35 : vector<1x4xf32> to vector<8x4xf32>
    %37 = arith.addf %34, %36 : vector<8x4xf32>
    %c104 = arith.constant 104 : index
    %c0_16 = arith.constant 0 : index
    %38 = vector.load %arg2[%c104, %c0_16] : memref<112x128xf32, #tpu.memory_space<vmem>>, vector<1x4xf32>
    %c105 = arith.constant 105 : index
    %c0_17 = arith.constant 0 : index
    %39 = vector.load %arg2[%c105, %c0_17] : memref<112x128xf32, #tpu.memory_space<vmem>>, vector<1x4xf32>
    %c106 = arith.constant 106 : index
    %c0_18 = arith.constant 0 : index
    %40 = vector.load %arg2[%c106, %c0_18] : memref<112x128xf32, #tpu.memory_space<vmem>>, vector<1x4xf32>
    %cst_19 = arith.constant 5.000000e-01 : f32
    %41 = vector.broadcast %cst_19 : f32 to vector<1x4xf32>
    %42 = arith.cmpf ogt, %38, %41 : vector<1x4xf32>
    %43 = arith.negf %37 : vector<8x4xf32>
    %44 = math.exp %43 : vector<8x4xf32>
    %cst_20 = arith.constant 1.000000e+00 : f32
    %45 = vector.broadcast %cst_20 : f32 to vector<8x4xf32>
    %46 = arith.addf %45, %44 : vector<8x4xf32>
    %47 = arith.divf %45, %46 : vector<8x4xf32>
    %48 = vector.broadcast %39 : vector<1x4xf32> to vector<8x4xf32>
    %49 = arith.mulf %47, %48 : vector<8x4xf32>
    %50 = vector.broadcast %40 : vector<1x4xf32> to vector<8x4xf32>
    %51 = arith.addf %49, %50 : vector<8x4xf32>
    %52 = vector.shape_cast %42 : vector<1x4xi1> to vector<1x4xi1>
    %53 = vector.broadcast %52 : vector<1x4xi1> to vector<8x4xi1>
    %54 = arith.select %53, %51, %37 : vector<8x4xi1>, vector<8x4xf32>
    %c0_21 = arith.constant 0 : index
    %c0_22 = arith.constant 0 : index
    %55 = vector.load %arg3[%c0_21, %c0_22] : memref<8x4xf32, #tpu.memory_space<vmem>>, vector<8x4xf32>
    tpu.vector_store %arg3[%c0_21, %c0_22], %54 {strides = array<i32>} : memref<8x4xf32, #tpu.memory_space<vmem>>, vector<8x4xf32>,
    return
  }
}

</mosaic_0001>

<llo_original>
// kernel: basenn_forward.1
$region0: #{basenn_forward.1}
  #allocation0 [shape = 'u32[]', space=smem, size = 0x4, offset = 0x4, fixed_abs, tag = 'smem constant byte address 0x4 - core index']
  #allocation1 [shape = 'u32[144,128]{1,0:T(1,128)}', space=vmem, size = 0x12000, scoped, tag = 'internal scratch']
  %s0 = inlined_call_operand.vmem [shape: f32[8,3], index: 0, kind: input, shape index: {}]
  %s1 = inlined_call_operand.vmem [shape: s32[8,2], index: 1, kind: input, shape index: {}]
  %s2 = inlined_call_operand.hbm [shape: f32[112,128], index: 2, kind: input, shape index: {}]
  %s3 = inlined_call_operand.vmem [shape: f32[8,4], index: 3, kind: output, shape index: {}]
  %s4 = sld [smem:[#allocation0]]
  $region26: #{basenn_forward.1} parent=0
    _
  %s6 = ssub.s32 1, %s4
  %s7 = scalar_select 0, %s6, %s4
  $region1: #{basenn_forward.1} parent=0
    #allocation2 [shape = 'u8[57344]{0}', space=vmem, size = 0xe000, scoped, tag = 'input window, operand 2, single buffered']
    #allocation3 [shape = 's32[1]{0}', space=sflag, size = 0x4, scoped, tag = 'scoped memory for basenn_forward.1']
    %8 = vsyncpa [#allocation3], 0
    // Predicated region
    $region2: #{basenn_forward.1} parent=1 // pred_check
      _
    $region3: #{basenn_forward.1} parent=1 // pred_check_branch
      %10 = sbr.rel (0) target = $region5
    $region4: #{basenn_forward.1} parent=1 // pred_region
      _
    $region5: #{basenn_forward.1} parent=1 // pred_fallthru
      _
    // Predicated region
    $region6: #{basenn_forward.1} parent=1 // pred_check
      _
    $region7: #{basenn_forward.1} parent=1 // pred_check_branch
      %12 = sbr.rel (0) target = $region9
    $region8: #{basenn_forward.1} parent=1 // pred_region
      _
    $region9: #{basenn_forward.1} parent=1 // pred_fallthru
      _
    // Predicated region
    $region10: #{basenn_forward.1} parent=1 // pred_check
      _
    $region11: #{basenn_forward.1} parent=1 // pred_check_branch
      %14 = sbr.rel (0) target = $region13
    $region12: #{basenn_forward.1} parent=1 // pred_region
      %s16 = ssub.s32 1792, 1792
      %17 = vsyncadd [#allocation3], %s16
      %s18 = sshll.u32 [#allocation2], 4
      %s19 = int_to_ptr.vmem [resolvable:$true] %s18
      %24 = dma.hbm_to_vmem [thread:$0]  %s2, 1792, %s19, [#allocation3], 128, 128, 8
    $region13: #{basenn_forward.1} parent=1 // pred_fallthru
      _
    // Predicated region
    $region14: #{basenn_forward.1} parent=1 // pred_check
      _
    $region15: #{basenn_forward.1} parent=1 // pred_check_branch
      %26 = sbr.rel (0) target = $region17
    $region16: #{basenn_forward.1} parent=1 // pred_region
      %27 = dma.done [#allocation3], 1792
    $region17: #{basenn_forward.1} parent=1 // pred_fallthru
      _
    %v28 = vld [vmem:[%s0] sm:$0xff]
    %v29 = vld [vmem:[#allocation2] sm:$0x7]
    %v30 = vld [vmem:[%s1] sm:$0xff]
    %v31 = vlaneseq
    %v32 = vand.u32 %v31, 127
    %33 = vset.pattern.permute.xlu0 0
    %34 = vperm.xlu0 %33, %v30
    %v35 = vpop.permute.xlu0 %34
    %vm36 = vcmp.eq.s32.totalorder %v32, %v35
    %v37 = vadd.s32 %v30, 10
    %38 = vset.pattern.permute.xlu0 1
    %39 = vperm.xlu0 %38, %v37
    %v40 = vpop.permute.xlu0 %39
    %vm41 = vcmp.eq.s32.totalorder %v32, %v40
    %vm42 = vmor %vm36, %vm41
    %v43 = vsel %vm42, 1, 0
    %v44 = vcvt.s32.f32 %v43
    %v45 = vld [vmem:[#allocation2 + $0x8] sm:$0xff]
    %v46 = vld [vmem:[#allocation2 + $0x10] sm:$0xff]
    %v47 = vld [vmem:[#allocation2 + $0x18] sm:$0x1]
    %vm48 = vcmask 138240
    %v50 = vsel %vm48, %v44, 0
    %vm52 = vcmask 1040384
    %v54 = vsel %vm52, %v47, 0
    %56 = vmatprep.subr.mxu0 0.0
    %57 = vmatpush1.msra.mxu0 %v45
    %58 = vmatprep.subr.mxu0 0.0
    %59 = vmatpush1.msra.mxu0 %v46
    %60 = vmatprep.subr.mxu0 0.0
    %61 = vmatpush1.msra.mxu0 %v54
    %62 = vmatprep.subr.mxu0 0.0
    %63 = vmatpush1.msra.mxu0 0.0
    %64 = vmatprep.subr.mxu0 0.0
    %65 = vmatpush1.msra.mxu0 0.0
    %66 = vmatprep.subr.mxu0 0.0
    %67 = vmatpush1.msra.mxu0 0.0
    %68 = vmatprep.subr.mxu0 0.0
    %69 = vmatpush1.msra.mxu0 0.0
    %70 = vmatprep.subr.mxu0 0.0
    %71 = vmatpush1.msra.mxu0 0.0
    %72 = vmatprep.subr.mxu0 0.0
    %73 = vmatpush1.msra.mxu0 0.0
    %74 = vmatprep.subr.mxu0 0.0
    %75 = vmatpush1.msra.mxu0 0.0
    %76 = vmatprep.subr.mxu0 0.0
    %77 = vmatpush1.msra.mxu0 0.0
    %78 = vmatprep.subr.mxu0 0.0
    %79 = vmatpush1.msra.mxu0 0.0
    %80 = vmatprep.subr.mxu0 0.0
    %81 = vmatpush1.msra.mxu0 0.0
    %82 = vmatprep.subr.mxu0 0.0
    %83 = vmatpush1.msra.mxu0 0.0
    %84 = vmatprep.subr.mxu0 0.0
    %85 = vmatpush1.msra.mxu0 0.0
    %86 = vmatprep.subr.mxu0 0.0
    %87 = vmatpush1.msra.mxu0 0.0
    %88 = vmatprep.subr.mxu0 0.0
    %89 = vmatpush1.msra.mxu0 0.0
    %90 = vmatprep.subr.mxu0 0.0
    %91 = vmatpush1.msra.mxu0 0.0
    %92 = vmatprep.subr.mxu0 0.0
    %93 = vmatpush1.msra.mxu0 0.0
    %94 = vmatprep.subr.mxu0 0.0
    %95 = vmatpush1.msra.mxu0 0.0
    %96 = vmatprep.subr.mxu0 0.0
    %97 = vmatpush1.msra.mxu0 0.0
    %98 = vmatprep.subr.mxu0 0.0
    %99 = vmatpush1.msra.mxu0 0.0
    %100 = vmatprep.subr.mxu0 0.0
    %101 = vmatpush1.msra.mxu0 0.0
    %102 = vmatprep.subr.mxu0 0.0
    %103 = vmatpush1.msra.mxu0 0.0
    %104 = vmatprep.subr.mxu0 0.0
    %105 = vmatpush1.msra.mxu0 0.0
    %106 = vmatprep.subr.mxu0 0.0
    %107 = vmatpush1.msra.mxu0 0.0
    %108 = vmatprep.subr.mxu0 0.0
    %109 = vmatpush1.msra.mxu0 0.0
    %110 = vmatprep.subr.mxu0 0.0
    %111 = vmatpush1.msra.mxu0 0.0
    %112 = vmatprep.subr.mxu0 0.0
    %113 = vmatpush1.msra.mxu0 0.0
    %114 = vmatprep.subr.mxu0 0.0
    %115 = vmatpush1.msra.mxu0 0.0
    %116 = vmatprep.subr.mxu0 0.0
    %117 = vmatpush1.msra.mxu0 0.0
    %118 = vmatprep.subr.mxu0 0.0
    %119 = vmatpush1.msra.mxu0 0.0
    %120 = vmatprep.mubr.f32.mxu0 0.0
    %121 = vmatmul.mubr.f32.gmra.mrb[0].mxu0 %v50
    %v122 = vpop.f32.mrb[0].mxu0
    %v123 = vadd.f32 0.0, %v122
    %v124 = vpop.f32.mrb[0].mxu0
    %125 = vdwg.mxu0
    %vm126 = vcmask 23552
    %v128 = vsel %vm126, %v28, 0
    %vm130 = vcmask 1042432
    %v132 = vsel %vm130, %v29, 0
    %134 = vmatprep.subr.mxu0 0.0
    %135 = vmatpush1.msra.mxu0 %v132
    %136 = vmatprep.subr.mxu0 0.0
    %137 = vmatpush1.msra.mxu0 0.0
    %138 = vmatprep.subr.mxu0 0.0
    %139 = vmatpush1.msra.mxu0 0.0
    %140 = vmatprep.subr.mxu0 0.0
    %141 = vmatpush1.msra.mxu0 0.0
    %142 = vmatprep.subr.mxu0 0.0
    %143 = vmatpush1.msra.mxu0 0.0
    %144 = vmatprep.subr.mxu0 0.0
    %145 = vmatpush1.msra.mxu0 0.0
    %146 = vmatprep.subr.mxu0 0.0
    %147 = vmatpush1.msra.mxu0 0.0
    %148 = vmatprep.subr.mxu0 0.0
    %149 = vmatpush1.msra.mxu0 0.0
    %150 = vmatprep.subr.mxu0 0.0
    %151 = vmatpush1.msra.mxu0 0.0
    %152 = vmatprep.subr.mxu0 0.0
    %153 = vmatpush1.msra.mxu0 0.0
    %154 = vmatprep.subr.mxu0 0.0
    %155 = vmatpush1.msra.mxu0 0.0
    %156 = vmatprep.subr.mxu0 0.0
    %157 = vmatpush1.msra.mxu0 0.0
    %158 = vmatprep.subr.mxu0 0.0
    %159 = vmatpush1.msra.mxu0 0.0
    %160 = vmatprep.subr.mxu0 0.0
    %161 = vmatpush1.msra.mxu0 0.0
    %162 = vmatprep.subr.mxu0 0.0
    %163 = vmatpush1.msra.mxu0 0.0
    %164 = vmatprep.subr.mxu0 0.0
    %165 = vmatpush1.msra.mxu0 0.0
    %166 = vmatprep.subr.mxu0 0.0
    %167 = vmatpush1.msra.mxu0 0.0
    %168 = vmatprep.subr.mxu0 0.0
    %169 = vmatpush1.msra.mxu0 0.0
    %170 = vmatprep.subr.mxu0 0.0
    %171 = vmatpush1.msra.mxu0 0.0
    %172 = vmatprep.subr.mxu0 0.0
    %173 = vmatpush1.msra.mxu0 0.0
    %174 = vmatprep.subr.mxu0 0.0
    %175 = vmatpush1.msra.mxu0 0.0
    %176 = vmatprep.subr.mxu0 0.0
    %177 = vmatpush1.msra.mxu0 0.0
    %178 = vmatprep.subr.mxu0 0.0
    %179 = vmatpush1.msra.mxu0 0.0
    %180 = vmatprep.subr.mxu0 0.0
    %181 = vmatpush1.msra.mxu0 0.0
    %182 = vmatprep.subr.mxu0 0.0
    %183 = vmatpush1.msra.mxu0 0.0
    %184 = vmatprep.subr.mxu0 0.0
    %185 = vmatpush1.msra.mxu0 0.0
    %186 = vmatprep.subr.mxu0 0.0
    %187 = vmatpush1.msra.mxu0 0.0
    %188 = vmatprep.subr.mxu0 0.0
    %189 = vmatpush1.msra.mxu0 0.0
    %190 = vmatprep.subr.mxu0 0.0
    %191 = vmatpush1.msra.mxu0 0.0
    %192 = vmatprep.subr.mxu0 0.0
    %193 = vmatpush1.msra.mxu0 0.0
    %194 = vmatprep.subr.mxu0 0.0
    %195 = vmatpush1.msra.mxu0 0.0
    %196 = vmatprep.subr.mxu0 0.0
    %197 = vmatpush1.msra.mxu0 0.0
    %198 = vmatprep.mubr.f32.mxu0 0.0
    %199 = vmatmul.mubr.f32.gmra.mrb[0].mxu0 %v128
    %v200 = vpop.f32.mrb[0].mxu0
    %v201 = vadd.f32 %v123, %v200
    %v202 = vpop.f32.mrb[0].mxu0
    %203 = vdwg.mxu0
    %v204 = vld [vmem:[#allocation2 + $0x20] sm:$0x1]
    %v205 = vlaneseq
    %v206 = vshrl.u32 %v205, 7
    %v207 = vsub.s32 0, %v206
    %v208 = vrot.slane %v204, %v207
    %v209 = vadd.f32 %v201, %v208
    %v210 = vmax.f32 %v209, 0.0
    %v211 = vld [vmem:[#allocation2 + $0x28] sm:$0xff]
    %v212 = vld [vmem:[#allocation2 + $0x30] sm:$0xff]
    %v213 = vld [vmem:[#allocation2 + $0x38] sm:$0xff]
    %v214 = vld [vmem:[#allocation2 + $0x40] sm:$0xff]
    %v215 = vld [vmem:[#allocation2 + $0x48] sm:$0x1]
    %v216 = vlaneseq
    %v217 = vshrl.u32 %v216, 7
    %v218 = vsub.s32 0, %v217
    %v219 = vrot.slane %v215, %v218
    %vm220 = vcmask 261120
    %v222 = vsel %vm220, %v210, 0
    %224 = vmatprep.subr.mxu0 0.0
    %225 = vmatpush1.msra.mxu0 %v211
    %226 = vmatprep.subr.mxu0 0.0
    %227 = vmatpush1.msra.mxu0 %v212
    %228 = vmatprep.subr.mxu0 0.0
    %229 = vmatpush1.msra.mxu0 %v213
    %230 = vmatprep.subr.mxu0 0.0
    %231 = vmatpush1.msra.mxu0 %v214
    %232 = vmatprep.subr.mxu0 0.0
    %233 = vmatpush1.msra.mxu0 0.0
    %234 = vmatprep.subr.mxu0 0.0
    %235 = vmatpush1.msra.mxu0 0.0
    %236 = vmatprep.subr.mxu0 0.0
    %237 = vmatpush1.msra.mxu0 0.0
    %238 = vmatprep.subr.mxu0 0.0
    %239 = vmatpush1.msra.mxu0 0.0
    %240 = vmatprep.subr.mxu0 0.0
    %241 = vmatpush1.msra.mxu0 0.0
    %242 = vmatprep.subr.mxu0 0.0
    %243 = vmatpush1.msra.mxu0 0.0
    %244 = vmatprep.subr.mxu0 0.0
    %245 = vmatpush1.msra.mxu0 0.0
    %246 = vmatprep.subr.mxu0 0.0
    %247 = vmatpush1.msra.mxu0 0.0
    %248 = vmatprep.subr.mxu0 0.0
    %249 = vmatpush1.msra.mxu0 0.0
    %250 = vmatprep.subr.mxu0 0.0
    %251 = vmatpush1.msra.mxu0 0.0
    %252 = vmatprep.subr.mxu0 0.0
    %253 = vmatpush1.msra.mxu0 0.0
    %254 = vmatprep.subr.mxu0 0.0
    %255 = vmatpush1.msra.mxu0 0.0
    %256 = vmatprep.subr.mxu0 0.0
    %257 = vmatpush1.msra.mxu0 0.0
    %258 = vmatprep.subr.mxu0 0.0
    %259 = vmatpush1.msra.mxu0 0.0
    %260 = vmatprep.subr.mxu0 0.0
    %261 = vmatpush1.msra.mxu0 0.0
    %262 = vmatprep.subr.mxu0 0.0
    %263 = vmatpush1.msra.mxu0 0.0
    %264 = vmatprep.subr.mxu0 0.0
    %265 = vmatpush1.msra.mxu0 0.0
    %266 = vmatprep.subr.mxu0 0.0
    %267 = vmatpush1.msra.mxu0 0.0
    %268 = vmatprep.subr.mxu0 0.0
    %269 = vmatpush1.msra.mxu0 0.0
    %270 = vmatprep.subr.mxu0 0.0
    %271 = vmatpush1.msra.mxu0 0.0
    %272 = vmatprep.subr.mxu0 0.0
    %273 = vmatpush1.msra.mxu0 0.0
    %274 = vmatprep.subr.mxu0 0.0
    %275 = vmatpush1.msra.mxu0 0.0
    %276 = vmatprep.subr.mxu0 0.0
    %277 = vmatpush1.msra.mxu0 0.0
    %278 = vmatprep.subr.mxu0 0.0
    %279 = vmatpush1.msra.mxu0 0.0
    %280 = vmatprep.subr.mxu0 0.0
    %281 = vmatpush1.msra.mxu0 0.0
    %282 = vmatprep.subr.mxu0 0.0
    %283 = vmatpush1.msra.mxu0 0.0
    %284 = vmatprep.subr.mxu0 0.0
    %285 = vmatpush1.msra.mxu0 0.0
    %286 = vmatprep.subr.mxu0 0.0
    %287 = vmatpush1.msra.mxu0 0.0
    %288 = vmatprep.mubr.f32.mxu0 0.0
    %289 = vmatmul.mubr.f32.gmra.mrb[0].mxu0 %v222
    %v290 = vpop.f32.mrb[0].mxu0
    %v291 = vadd.f32 %v219, %v290
    %v292 = vpop.f32.mrb[0].mxu0
    %293 = vdwg.mxu0
    %v294 = vmax.f32 %v291, 0.0
    %v295 = vld [vmem:[#allocation2 + $0x50] sm:$0xff]
    %v296 = vld [vmem:[#allocation2 + $0x58] sm:$0xff]
    %v297 = vld [vmem:[#allocation2 + $0x60] sm:$0x1]
    %v298 = vlaneseq
    %v299 = vshrl.u32 %v298, 7
    %v300 = vsub.s32 0, %v299
    %v301 = vrot.slane %v297, %v300
    %vm302 = vcmask 130048
    %v304 = vsel %vm302, %v294, 0
    %306 = vmatprep.subr.mxu0 0.0
    %307 = vmatpush1.msra.mxu0 %v295
    %308 = vmatprep.subr.mxu0 0.0
    %309 = vmatpush1.msra.mxu0 %v296
    %310 = vmatprep.subr.mxu0 0.0
    %311 = vmatpush1.msra.mxu0 0.0
    %312 = vmatprep.subr.mxu0 0.0
    %313 = vmatpush1.msra.mxu0 0.0
    %314 = vmatprep.subr.mxu0 0.0
    %315 = vmatpush1.msra.mxu0 0.0
    %316 = vmatprep.subr.mxu0 0.0
    %317 = vmatpush1.msra.mxu0 0.0
    %318 = vmatprep.subr.mxu0 0.0
    %319 = vmatpush1.msra.mxu0 0.0
    %320 = vmatprep.subr.mxu0 0.0
    %321 = vmatpush1.msra.mxu0 0.0
    %322 = vmatprep.subr.mxu0 0.0
    %323 = vmatpush1.msra.mxu0 0.0
    %324 = vmatprep.subr.mxu0 0.0
    %325 = vmatpush1.msra.mxu0 0.0
    %326 = vmatprep.subr.mxu0 0.0
    %327 = vmatpush1.msra.mxu0 0.0
    %328 = vmatprep.subr.mxu0 0.0
    %329 = vmatpush1.msra.mxu0 0.0
    %330 = vmatprep.subr.mxu0 0.0
    %331 = vmatpush1.msra.mxu0 0.0
    %332 = vmatprep.subr.mxu0 0.0
    %333 = vmatpush1.msra.mxu0 0.0
    %334 = vmatprep.subr.mxu0 0.0
    %335 = vmatpush1.msra.mxu0 0.0
    %336 = vmatprep.subr.mxu0 0.0
    %337 = vmatpush1.msra.mxu0 0.0
    %338 = vmatprep.subr.mxu0 0.0
    %339 = vmatpush1.msra.mxu0 0.0
    %340 = vmatprep.subr.mxu0 0.0
    %341 = vmatpush1.msra.mxu0 0.0
    %342 = vmatprep.subr.mxu0 0.0
    %343 = vmatpush1.msra.mxu0 0.0
    %344 = vmatprep.subr.mxu0 0.0
    %345 = vmatpush1.msra.mxu0 0.0
    %346 = vmatprep.subr.mxu0 0.0
    %347 = vmatpush1.msra.mxu0 0.0
    %348 = vmatprep.subr.mxu0 0.0
    %349 = vmatpush1.msra.mxu0 0.0
    %350 = vmatprep.subr.mxu0 0.0
    %351 = vmatpush1.msra.mxu0 0.0
    %352 = vmatprep.subr.mxu0 0.0
    %353 = vmatpush1.msra.mxu0 0.0
    %354 = vmatprep.subr.mxu0 0.0
    %355 = vmatpush1.msra.mxu0 0.0
    %356 = vmatprep.subr.mxu0 0.0
    %357 = vmatpush1.msra.mxu0 0.0
    %358 = vmatprep.subr.mxu0 0.0
    %359 = vmatpush1.msra.mxu0 0.0
    %360 = vmatprep.subr.mxu0 0.0
    %361 = vmatpush1.msra.mxu0 0.0
    %362 = vmatprep.subr.mxu0 0.0
    %363 = vmatpush1.msra.mxu0 0.0
    %364 = vmatprep.subr.mxu0 0.0
    %365 = vmatpush1.msra.mxu0 0.0
    %366 = vmatprep.subr.mxu0 0.0
    %367 = vmatpush1.msra.mxu0 0.0
    %368 = vmatprep.subr.mxu0 0.0
    %369 = vmatpush1.msra.mxu0 0.0
    %370 = vmatprep.mubr.f32.mxu0 0.0
    %371 = vmatmul.mubr.f32.gmra.mrb[0].mxu0 %v304
    %v372 = vpop.f32.mrb[0].mxu0
    %v373 = vadd.f32 %v301, %v372
    %v374 = vpop.f32.mrb[0].mxu0
    %375 = vdwg.mxu0
    %v376 = vld [vmem:[#allocation2 + $0x68] sm:$0x1]
    %v377 = vld [vmem:[#allocation2 + $0x69] sm:$0x1]
    %v378 = vld [vmem:[#allocation2 + $0x6a] sm:$0x1]
    %vm379 = vcmp.gt.f32.partialorder %v376, 0.5
    %v380 = vxor.u32 %v373, 2147483648
    %v381 = vmul.f32 %v380, 1.442695
    %v382 = vpow.pop %v381
    %v383 = vadd.f32 %v382, 1.0
    %v384 = vrcp.pop %v383
    %v385 = vmul.f32 1.0, %v384
    %v386 = vlaneseq
    %v387 = vshrl.u32 %v386, 7
    %v388 = vsub.s32 0, %v387
    %v389 = vrot.slane %v377, %v388
    %v390 = vmul.f32 %v385, %v389
    %v391 = vlaneseq
    %v392 = vshrl.u32 %v391, 7
    %v393 = vsub.s32 0, %v392
    %v394 = vrot.slane %v378, %v393
    %v395 = vadd.f32 %v390, %v394
    %v396 = vsel %vm379, 1, 0
    %v397 = vlaneseq
    %v398 = vshrl.u32 %v397, 7
    %v399 = vsub.s32 0, %v398
    %v400 = vrot.slane %v396, %v399
    %vm401 = vcmp.eq.s32.totalorder %v400, 1
    %v402 = vsel %vm401, %v395, %v373
    %vm403 = vcmask 31744
    %404 = vst.msk [vmem:[%s3] sm:$0xff] %vm403, %v402
    // Predicated region
    $region18: #{basenn_forward.1} parent=1 // pred_check
      _
    $region19: #{basenn_forward.1} parent=1 // pred_check_branch
      %406 = sbr.rel (0) target = $region21
    $region20: #{basenn_forward.1} parent=1 // pred_region
      _
    $region21: #{basenn_forward.1} parent=1 // pred_fallthru
      _
    // Predicated region
    $region22: #{basenn_forward.1} parent=1 // pred_check
      _
    $region23: #{basenn_forward.1} parent=1 // pred_check_branch
      %408 = sbr.rel (0) target = $region25
    $region24: #{basenn_forward.1} parent=1 // pred_region
      _
    $region25: #{basenn_forward.1} parent=1 // pred_fallthru
      _
    %409 = vsyncpa [#allocation3], 1

</llo_original>
